<compile_context>
chip_gen: v6e
topology: v6e:2x2x1
jax: 0.10.0
libtpu: 0.0.40
codegen_flags: <defaults>
</compile_context>

<pallas_src>
import numpy as np
import jax
import jax.numpy as jnp
from jax.experimental import pallas as pl
from jax.experimental.pallas import tpu as pltpu


# ----------------------------------------------------------------------------
# Pallas kernels.
# ----------------------------------------------------------------------------
def _ttlinear_kernel_noacc(x_ref, w_ref, b_ref, o_ref):
    """K axis collapsed: single-shot (tm,K) @ (K,tn) + bias, no accumulator."""
    o_ref[...] = (
        jnp.dot(x_ref[...], w_ref[...], preferred_element_type=jnp.float32)
        + b_ref[...].astype(jnp.float32)
    ).astype(o_ref.dtype)


def _ttlinear_kernel_acc(x_ref, w_ref, b_ref, o_ref, acc_ref):
    """3-axis tiled matmul with f32 VMEM accumulator (large-K fallback)."""
    k = pl.program_id(2)

    @pl.when(k == 0)
    def _():
        acc_ref[...] = jnp.zeros_like(acc_ref)

    acc_ref[...] += jnp.dot(x_ref[...], w_ref[...],
                            preferred_element_type=jnp.float32)

    @pl.when(k == pl.num_programs(2) - 1)
    def _():
        o_ref[...] = (acc_ref[...] + b_ref[...].astype(jnp.float32)
                      ).astype(o_ref.dtype)


# ----------------------------------------------------------------------------
# TT assembly (plain-JAX glue, matches tt_to_matrix of the PyTorch reference).
# ----------------------------------------------------------------------------
def tt_to_matrix(in_shape, out_shape, cores):
    """Assemble W[(i1..id), (j1..jd)] from TT cores (r_{k-1}, n_k, m_k, r_k)."""
    res = cores[0]                                    # (1, n1, m1, r1)
    for core in cores[1:]:
        res = jnp.tensordot(res, core, axes=[[-1], [0]])
    res = jnp.squeeze(res, axis=(0, -1))              # (n1,m1,...,nd,md)
    d = len(in_shape)
    perm = tuple(range(0, 2 * d, 2)) + tuple(range(1, 2 * d, 2))
    res = jnp.transpose(res, perm)                    # (n1..nd, m1..md)
    return res.reshape(int(np.prod(in_shape)), int(np.prod(out_shape)))


def _round_up(x, m):
    return ((x + m - 1) // m) * m


def _sublane_multiple(dtype):
    # native sublane packing: f32 -> 8, bf16 -> 16, int8/fp8 -> 32
    return max(8, 32 // jnp.dtype(dtype).itemsize)


# ----------------------------------------------------------------------------
# One-time weight preparation (pad + cast, tile-size selection for N / K).
# ----------------------------------------------------------------------------
def prepare_dense_weight(W, bias=None, *, tm_hint=512, tn=512, tk=1024,
                         compute_dtype=jnp.bfloat16,
                         vmem_budget_bytes=14 * 1024 * 1024):
    """Pad + cast the (static) dense weight / bias once and pick N/K tiling."""
    K, N = W.shape
    itemsize = jnp.dtype(compute_dtype).itemsize

    Np = _round_up(N, 128)
    tn = min(tn, Np)
    Np = _round_up(N, tn)

    Kp = _round_up(K, 128)
    # Collapse the K grid axis whenever the full-K strips (double-buffered)
    # plus the output tile fit comfortably in scoped VMEM (even v5e's 16 MiB).
    strip_bytes = (2 * Kp * (tm_hint + tn) * itemsize
                   + 2 * tm_hint * tn * 4 + 2 * tn * 4)
    if strip_bytes <= vmem_budget_bytes:
        tk = Kp
    else:
        tk = min(tk, Kp)
        Kp = _round_up(K, tk)

    Wp = jnp.pad(W, ((0, Kp - K), (0, Np - N))).astype(compute_dtype)
    if bias is None:
        bp = jnp.zeros((1, Np), jnp.float32)
    else:
        bp = jnp.pad(bias.astype(jnp.float32).reshape(1, N),
                     ((0, 0), (0, Np - N)))
    return dict(Wp=Wp, bp=bp, K=K, N=N, Kp=Kp, Np=Np, tk=tk, tn=tn,
                compute_dtype=compute_dtype)


# ----------------------------------------------------------------------------
# Forward pass: pad x, build grid, pallas_call.
# ----------------------------------------------------------------------------
def tt_linear_dense(x, prep, *, tm=512, out_dtype=None):
    """y = x @ W + bias with W/bias pre-prepared by prepare_dense_weight."""
    head = x.shape[:-1]
    K = x.shape[-1]
    assert K == prep["K"], "feature dim mismatch"
    M = int(np.prod(head)) if head else 1

    compute_dtype = prep["compute_dtype"]
    out_dtype = x.dtype if out_dtype is None else out_dtype
    itemsize = jnp.dtype(compute_dtype).itemsize
    out_itemsize = jnp.dtype(out_dtype).itemsize
    N, Kp, Np, tk, tn = prep["N"], prep["Kp"], prep["Np"], prep["tk"], prep["tn"]

    # M tiling: round to the dtype's native sublane packing, clamp the tile.
    sub = _sublane_multiple(compute_dtype)
    Mp = _round_up(M, sub)
    tm = min(tm, Mp)
    Mp = _round_up(M, tm)

    x2 = x.reshape(M, K)
    xp = jnp.pad(x2, ((0, Mp - M), (0, Kp - K))).astype(compute_dtype)

    grid_m = Mp // tm
    grid_n = Np // tn
    tn_call = tn
    # Megacore (v7x has 2 TensorCores): if both parallel axes would have a
    # single block, split N into two tiles (Np unchanged, so prep["Wp"] is
    # still valid).
    if grid_m == 1 and grid_n == 1 and tn % 256 == 0:
        tn_call = tn // 2
        grid_n = Np // tn_call

    collapse_k = (tk == Kp)
    tk_eff = Kp if collapse_k else tk

    # VMEM budget: double-buffered inputs + output (+ accumulator).
    est_vmem = (2 * (tm * tk_eff + tk_eff * tn_call) * itemsize
                + 2 * tn_call * 4
                + 2 * tm * tn_call * out_itemsize
                + (0 if collapse_k else tm * tn_call * 4))
    vmem_limit = int(min(max(2 * est_vmem, 32 << 20), 64 << 20))

    cost = pl.CostEstimate(
        flops=2 * Mp * Np * Kp,
        transcendentals=0,
        bytes_accessed=(grid_n * Mp * Kp + grid_m * Kp * Np) * itemsize
        + Mp * Np * out_itemsize + grid_m * Np * 4,
    )

    if collapse_k:
        grid = (grid_m, grid_n)
        in_specs = [
            pl.BlockSpec((tm, Kp), lambda i, j: (i, 0)),          # x strip
            pl.BlockSpec((Kp, tn_call), lambda i, j: (0, j)),     # W strip
            pl.BlockSpec((1, tn_call), lambda i, j: (0, j)),      # bias tile
        ]
        out_specs = pl.BlockSpec((tm, tn_call), lambda i, j: (i, j))
        scratch_shapes = []
        kernel = _ttlinear_kernel_noacc
        dims = ("parallel", "parallel")
    else:
        grid = (grid_m, grid_n, Kp // tk)
        in_specs = [
            pl.BlockSpec((tm, tk), lambda i, j, k: (i, k)),       # x tile
            pl.BlockSpec((tk, tn_call), lambda i, j, k: (k, j)),  # W tile
            pl.BlockSpec((1, tn_call), lambda i, j, k: (0, j)),   # bias tile
        ]
        out_specs = pl.BlockSpec((tm, tn_call), lambda i, j, k: (i, j))
        scratch_shapes = [pltpu.VMEM((tm, tn_call), jnp.float32)]
        kernel = _ttlinear_kernel_acc
        dims = ("parallel", "parallel", "arbitrary")

    out = pl.pallas_call(
        kernel,
        out_shape=jax.ShapeDtypeStruct((Mp, Np), out_dtype),
        grid_spec=pltpu.PrefetchScalarGridSpec(
            num_scalar_prefetch=0,
            grid=grid,
            in_specs=in_specs,
            out_specs=out_specs,
            scratch_shapes=scratch_shapes,
        ),
        compiler_params=pltpu.CompilerParams(
            dimension_semantics=dims,
            vmem_limit_bytes=vmem_limit,
            allow_input_fusion=[True, True, False],
        ),
        cost_estimate=cost,
    )(xp, prep["Wp"], prep["bp"])

    return out[:M, :N].reshape(*head, N)


def tt_linear(x, cores, bias, in_shape, out_shape, **kwargs):
    """Full TTLinear forward (reassemble=True path): assemble W, then matmul."""
    # TODO(synk): TT-factored contraction path (O(M * sum r*n*m*r)) for small
    #             ranks instead of materializing the dense W.
    W = tt_to_matrix(in_shape, out_shape, cores)
    out_dtype = kwargs.pop("out_dtype", None)
    tm = kwargs.pop("tm", 512)
    prep = prepare_dense_weight(W, bias, **kwargs)
    return tt_linear_dense(x, prep, tm=tm, out_dtype=out_dtype)


# ----------------------------------------------------------------------------
# Deterministic parameter init matching TTLinear.reset_parameters.
# ----------------------------------------------------------------------------
def init_ttlinear_params(key, in_shape, out_shape, rank):
    if not isinstance(rank, (list, tuple)):
        rank = [1] + (len(in_shape) - 1) * [rank] + [1]
    keys = jax.random.split(key, len(in_shape) + 1)
    cores = []
    for kk, (r0, n, m, r1) in zip(keys[:-1],
                                  zip(rank[:-1], in_shape, out_shape, rank[1:])):
        cores.append(0.02 * jax.random.normal(kk, (r0, n, m, r1), jnp.float32))
    bound = 1.0 / float(np.sqrt(np.prod(in_shape)))
    bias = jax.random.uniform(keys[-1], (int(np.prod(out_shape)),),
                              jnp.float32, minval=-bound, maxval=bound)
    return cores, bias


if __name__ == "__main__":
    key = jax.random.PRNGKey(0)
    k_param, k_x = jax.random.split(key)

    in_shape = (4, 8)     # in_features  = 32
    out_shape = (4, 8)    # out_features = 32
    rank = 2              # -> TT ranks [1, 2, 1]

    cores, bias = init_ttlinear_params(k_param, in_shape, out_shape, rank)

    # input: (*head, in_features) = (2, 8, 32)
    x = jax.random.normal(k_x, (2, 8, int(np.prod(in_shape))), jnp.float32)

    # Assemble + prepare W once (hoisted out of the per-call hot path).
    W = tt_to_matrix(in_shape, out_shape, cores)

    # Plain f32 reference (F.linear(x, W.T, bias) == x @ W + bias).
    x2 = np.asarray(x).reshape(-1, W.shape[0])
    y_ref = (x2 @ np.asarray(W) + np.asarray(bias)).reshape(
        x.shape[:-1] + (W.shape[1],))

    # 1) production path: bf16 inputs, f32 accumulate, weight prepared once.
    prep_bf16 = prepare_dense_weight(W, bias, compute_dtype=jnp.bfloat16)
    y_bf16 = jax.block_until_ready(tt_linear_dense(x, prep_bf16))
    assert y_bf16.shape == (2, 8, int(np.prod(out_shape)))
    assert np.allclose(np.asarray(y_bf16), y_ref, atol=1e-3, rtol=1e-2)

    # 2) f32 validation path (tight tolerance).
    prep_f32 = prepare_dense_weight(W, bias, compute_dtype=jnp.float32)
    y_f32 = jax.block_until_ready(tt_linear_dense(x, prep_f32))
    assert np.allclose(np.asarray(y_f32), y_ref, atol=1e-5, rtol=1e-5)

    # 3) convenience wrapper (assemble + prepare + matmul in one call).
    y_conv = jax.block_until_ready(
        tt_linear(x, cores, bias, in_shape, out_shape))
    assert np.allclose(np.asarray(y_conv), y_ref, atol=1e-3, rtol=1e-2)

    print("KERNEL_OK")
</pallas_src>

<mosaic_0001>
module attributes {stable_mosaic.version = 11 : i64} {
  func.func @_ttlinear_kernel_noacc(%arg0: i32, %arg1: i32, %arg2: memref<16x128xbf16, #tpu.memory_space<vmem>>, %arg3: memref<128x128xbf16, #tpu.memory_space<vmem>>, %arg4: memref<1x128xf32, #tpu.memory_space<vmem>>, %arg5: memref<16x128xf32, #tpu.memory_space<vmem>>) attributes {dimension_semantics = [#tpu.dimension_semantics<parallel>, #tpu.dimension_semantics<parallel>], iteration_bounds = array<i64: 1, 1>, scalar_prefetch = 0 : i64, scratch_operands = 0 : i64, tpu.core_type = #tpu.core_type<tc>, window_params = [{transform_indices = @transform_0, window_bounds = array<i64: 16, 128>}, {transform_indices = @transform_1, window_bounds = array<i64: 128, 128>}, {transform_indices = @transform_2, window_bounds = array<i64: 1, 128>}, {transform_indices = @transform_3, window_bounds = array<i64: 16, 128>}]} {
    %c0 = arith.constant 0 : index
    %c0_0 = arith.constant 0 : index
    %0 = vector.load %arg2[%c0, %c0_0] : memref<16x128xbf16, #tpu.memory_space<vmem>>, vector<16x128xbf16>
    %c0_1 = arith.constant 0 : index
    %c0_2 = arith.constant 0 : index
    %1 = vector.load %arg3[%c0_1, %c0_2] : memref<128x128xbf16, #tpu.memory_space<vmem>>, vector<128x128xbf16>
    %cst = arith.constant dense<0.000000e+00> : vector<16x128xf32>
    %2 = tpu.matmul %0, %1, %cst {dimension_numbers = #tpu.dot_dimension_numbers<[1], [0], [0], [1], [0, 0, 1, 1], [], []>} : vector<16x128xbf16>, vector<128x128xbf16>, vector<16x128xf32> -> vector<16x128xf32>
    %c0_3 = arith.constant 0 : index
    %c0_4 = arith.constant 0 : index
    %3 = vector.load %arg4[%c0_3, %c0_4] : memref<1x128xf32, #tpu.memory_space<vmem>>, vector<1x128xf32>
    %4 = vector.broadcast %3 : vector<1x128xf32> to vector<16x128xf32>
    %5 = arith.addf %2, %4 : vector<16x128xf32>
    %c0_5 = arith.constant 0 : index
    %c0_6 = arith.constant 0 : index
    %6 = vector.load %arg5[%c0_5, %c0_6] : memref<16x128xf32, #tpu.memory_space<vmem>>, vector<16x128xf32>
    tpu.vector_store %arg5[%c0_5, %c0_6], %5 {strides = array<i32>} : memref<16x128xf32, #tpu.memory_space<vmem>>, vector<16x128xf32>,
    return
  }
  func.func @transform_0(%arg0: i32, %arg1: i32) -> (i32, i32) {
    %c0_i32 = arith.constant 0 : i32
    %c0_i32_0 = arith.constant 0 : i32
    return %arg0, %c0_i32 : i32, i32
  }
  func.func @transform_1(%arg0: i32, %arg1: i32) -> (i32, i32) {
    %c0_i32 = arith.constant 0 : i32
    %c0_i32_0 = arith.constant 0 : i32
    return %c0_i32, %arg1 : i32, i32
  }
  func.func @transform_2(%arg0: i32, %arg1: i32) -> (i32, i32) {
    %c0_i32 = arith.constant 0 : i32
    %c0_i32_0 = arith.constant 0 : i32
    return %c0_i32, %arg1 : i32, i32
  }
  func.func @transform_3(%arg0: i32, %arg1: i32) -> (i32, i32) {
    %c0_i32 = arith.constant 0 : i32
    return %arg0, %arg1 : i32, i32
  }
}

</mosaic_0001>

<llo_original>
// kernel: tpu_custom_call.1
$region0: #{tpu_custom_call.1}
  #allocation0 [shape = 'u32[]', space=smem, size = 0x4, offset = 0x4, fixed_abs, tag = 'smem constant byte address 0x4 - core index']
  #allocation1 [shape = 'u32[144,128]{1,0:T(1,128)}', space=vmem, size = 0x12000, scoped, tag = 'internal scratch']
  %s0 = inlined_call_operand.hbm [shape: bf16[16,128], index: 0, kind: input, shape index: {}]
  %s1 = inlined_call_operand.hbm [shape: bf16[128,128], index: 1, kind: input, shape index: {}]
  %s2 = inlined_call_operand.vmem [shape: f32[1,128], index: 2, kind: input, shape index: {}]
  %s3 = inlined_call_operand.hbm [shape: f32[16,128], index: 3, kind: output, shape index: {}]
  %s4 = sld [smem:[#allocation0]]
  $region30: #{tpu_custom_call.1} parent=0
    _
  %s6 = ssub.s32 1, %s4
  %s7 = scalar_select 0, %s6, %s4
  $region1: #{tpu_custom_call.1} parent=0
    #allocation2 [shape = 'u8[4096]{0}', space=vmem, size = 0x1000, scoped, tag = 'input window, operand 0, single buffered']
    #allocation3 [shape = 's32[1]{0}', space=sflag, size = 0x4, scoped, tag = 'scoped memory for tpu_custom_call.1']
    #allocation4 [shape = 's32[1]{0}', space=sflag, size = 0x4, scoped, tag = 'scoped memory for tpu_custom_call.1']
    #allocation5 [shape = 'u8[32768]{0}', space=vmem, size = 0x8000, scoped, tag = 'input window, operand 1, single buffered']
    #allocation6 [shape = 's32[1]{0}', space=sflag, size = 0x4, scoped, tag = 'scoped memory for tpu_custom_call.1']
    #allocation7 [shape = 'u8[8192]{0}', space=vmem, size = 0x2000, scoped, tag = 'output window, operand 0, single buffered']
    %8 = vsyncpa [#allocation3], 0
    %9 = vsyncpa [#allocation6], 0
    %10 = vsyncpa [#allocation4], 0
    // Predicated region
    $region2: #{tpu_custom_call.1} parent=1 // pred_check
      _
    $region3: #{tpu_custom_call.1} parent=1 // pred_check_branch
      %12 = sbr.rel (0) target = $region5
    $region4: #{tpu_custom_call.1} parent=1 // pred_region
      %s14 = ssub.s32 128, 128
      %15 = vsyncadd [#allocation3], %s14
      %s16 = sshll.u32 [#allocation2], 4
      %s17 = int_to_ptr.vmem [resolvable:$true] %s16
      %22 = dma.hbm_to_vmem [thread:$0]  %s0, 128, %s17, [#allocation3], 64, 64, 4
    $region5: #{tpu_custom_call.1} parent=1 // pred_fallthru
      _
    // Predicated region
    $region6: #{tpu_custom_call.1} parent=1 // pred_check
      _
    $region7: #{tpu_custom_call.1} parent=1 // pred_check_branch
      %24 = sbr.rel (0) target = $region9
    $region8: #{tpu_custom_call.1} parent=1 // pred_region
      %s26 = ssub.s32 1024, 1024
      %27 = vsyncadd [#allocation6], %s26
      %s28 = sshll.u32 [#allocation5], 4
      %s29 = int_to_ptr.vmem [resolvable:$true] %s28
      %34 = dma.hbm_to_vmem [thread:$0]  %s1, 1024, %s29, [#allocation6], 64, 64, 4
    $region9: #{tpu_custom_call.1} parent=1 // pred_fallthru
      _
    // Predicated region
    $region10: #{tpu_custom_call.1} parent=1 // pred_check
      _
    $region11: #{tpu_custom_call.1} parent=1 // pred_check_branch
      %36 = sbr.rel (0) target = $region13
    $region12: #{tpu_custom_call.1} parent=1 // pred_region
      _
    $region13: #{tpu_custom_call.1} parent=1 // pred_fallthru
      _
    // Predicated region
    $region14: #{tpu_custom_call.1} parent=1 // pred_check
      _
    $region15: #{tpu_custom_call.1} parent=1 // pred_check_branch
      %38 = sbr.rel (0) target = $region17
    $region16: #{tpu_custom_call.1} parent=1 // pred_region
      %39 = dma.done [#allocation3], 128
    $region17: #{tpu_custom_call.1} parent=1 // pred_fallthru
      _
    // Predicated region
    $region18: #{tpu_custom_call.1} parent=1 // pred_check
      _
    $region19: #{tpu_custom_call.1} parent=1 // pred_check_branch
      %41 = sbr.rel (0) target = $region21
    $region20: #{tpu_custom_call.1} parent=1 // pred_region
      %42 = dma.done [#allocation6], 1024
    $region21: #{tpu_custom_call.1} parent=1 // pred_fallthru
      _
    %v44 = vld [vmem:[#allocation2] sm:$0xf]
    %v45 = vld [vmem:[#allocation2 + $0x4] sm:$0xf]
    %v46 = vld [vmem:[#allocation5] sm:$0xf]
    %v47 = vld [vmem:[#allocation5 + $0x4] sm:$0xf]
    %v48 = vld [vmem:[#allocation5 + $0x8] sm:$0xf]
    %v49 = vld [vmem:[#allocation5 + $0xc] sm:$0xf]
    %v50 = vld [vmem:[#allocation5 + $0x10] sm:$0xf]
    %v51 = vld [vmem:[#allocation5 + $0x14] sm:$0xf]
    %v52 = vld [vmem:[#allocation5 + $0x18] sm:$0xf]
    %v53 = vld [vmem:[#allocation5 + $0x1c] sm:$0xf]
    %v54 = vld [vmem:[#allocation5 + $0x20] sm:$0xf]
    %v55 = vld [vmem:[#allocation5 + $0x24] sm:$0xf]
    %v56 = vld [vmem:[#allocation5 + $0x28] sm:$0xf]
    %v57 = vld [vmem:[#allocation5 + $0x2c] sm:$0xf]
    %v58 = vld [vmem:[#allocation5 + $0x30] sm:$0xf]
    %v59 = vld [vmem:[#allocation5 + $0x34] sm:$0xf]
    %v60 = vld [vmem:[#allocation5 + $0x38] sm:$0xf]
    %v61 = vld [vmem:[#allocation5 + $0x3c] sm:$0xf]
    %v62 = vld [vmem:[%s2] sm:$0x1]
    %v64 = vlaneseq
    %v65 = vshrl.u32 %v64, 7
    %v66 = vsub.s32 0, %v65
    %v67 = vrot.slane %v62, %v66
    %v71 = vunpack.c.l.b16 %v44
    %v72 = vunpack.c.l.b16 %v45
    %v73 = vpack.c.b16 %v72, %v71
    %v91 = vunpack.c.l.b16 %v46
    %v92 = vunpack.c.l.b16 %v47
    %v93 = vunpack.c.l.b16 %v48
    %v94 = vunpack.c.l.b16 %v49
    %v95 = vunpack.c.l.b16 %v50
    %v96 = vunpack.c.l.b16 %v51
    %v97 = vunpack.c.l.b16 %v52
    %v98 = vunpack.c.l.b16 %v53
    %v99 = vunpack.c.l.b16 %v54
    %v100 = vunpack.c.l.b16 %v55
    %v101 = vunpack.c.l.b16 %v56
    %v102 = vunpack.c.l.b16 %v57
    %v103 = vunpack.c.l.b16 %v58
    %v104 = vunpack.c.l.b16 %v59
    %v105 = vunpack.c.l.b16 %v60
    %v106 = vunpack.c.l.b16 %v61
    %v107 = vpack.c.b16 %v92, %v91
    %v108 = vpack.c.b16 %v94, %v93
    %v109 = vpack.c.b16 %v96, %v95
    %v110 = vpack.c.b16 %v98, %v97
    %v111 = vpack.c.b16 %v100, %v99
    %v112 = vpack.c.b16 %v102, %v101
    %v113 = vpack.c.b16 %v104, %v103
    %v114 = vpack.c.b16 %v106, %v105
    %123 = vmatprep.subr.bf16.mxu0 0
    %124 = vmatpush1.bf16.msra.mxu0 %v114
    %125 = vmatprep.subr.bf16.mxu0 0
    %126 = vmatpush1.bf16.msra.mxu0 %v113
    %127 = vmatprep.subr.bf16.mxu0 0
    %128 = vmatpush1.bf16.msra.mxu0 %v112
    %129 = vmatprep.subr.bf16.mxu0 0
    %130 = vmatpush1.bf16.msra.mxu0 %v111
    %131 = vmatprep.subr.bf16.mxu0 0
    %132 = vmatpush1.bf16.msra.mxu0 %v110
    %133 = vmatprep.subr.bf16.mxu0 0
    %134 = vmatpush1.bf16.msra.mxu0 %v109
    %135 = vmatprep.subr.bf16.mxu0 0
    %136 = vmatpush1.bf16.msra.mxu0 %v108
    %137 = vmatprep.subr.bf16.mxu0 0
    %138 = vmatpush1.bf16.msra.mxu0 %v107
    %139 = vmatprep.subr.bf16.mxu0 0
    %140 = vmatpush2.bf16.msra.mxu0 0
    %141 = vmatprep.subr.bf16.mxu0 0
    %142 = vmatpush2.bf16.msra.mxu0 0
    %143 = vmatprep.subr.bf16.mxu0 0
    %144 = vmatpush2.bf16.msra.mxu0 0
    %145 = vmatprep.subr.bf16.mxu0 0
    %146 = vmatpush2.bf16.msra.mxu0 0
    %147 = vmatprep.subr.bf16.mxu0 0
    %148 = vmatpush2.bf16.msra.mxu0 0
    %149 = vmatprep.subr.bf16.mxu0 0
    %150 = vmatpush2.bf16.msra.mxu0 0
    %151 = vmatprep.subr.bf16.mxu0 0
    %152 = vmatpush2.bf16.msra.mxu0 0
    %153 = vmatprep.subr.bf16.mxu0 0
    %154 = vmatpush2.bf16.msra.mxu0 0
    %155 = vmatprep.mubr.bf16.mxu0 0
    %156 = vmatmul.mubr.bf16.gmra.mxu0 %v73
    %v157 = vpop.f32.mrf.mxu0
    %v158 = vadd.f32 %v67, %v157
    %v159 = vpop.f32.mrf.mxu0
    %v160 = vpop.f32.mrf.mxu0
    %v161 = vadd.f32 %v67, %v160
    %v162 = vpop.f32.mrf.mxu0
    %163 = vdwg.mxu0
    %164 = vst [vmem:[#allocation7] sm:$0xff] %v158
    %165 = vst [vmem:[#allocation7 + $0x8] sm:$0xff] %v161
    // Predicated region
    $region22: #{tpu_custom_call.1} parent=1 // pred_check
      _
    $region23: #{tpu_custom_call.1} parent=1 // pred_check_branch
      %167 = sbr.rel (0) target = $region25
    $region24: #{tpu_custom_call.1} parent=1 // pred_region
      %s169 = ssub.s32 256, 256
      %170 = vsyncadd [#allocation4], %s169
      %s171 = sshll.u32 [#allocation7], 4
      %s172 = int_to_ptr.vmem [resolvable:$true] %s171
      %177 = dma.vmem_to_hbm [thread:$0]  %s172, 256, %s3, [#allocation4], 128, 128, 8
    $region25: #{tpu_custom_call.1} parent=1 // pred_fallthru
      _
    // Predicated region
    $region26: #{tpu_custom_call.1} parent=1 // pred_check
      _
    $region27: #{tpu_custom_call.1} parent=1 // pred_check_branch
      %179 = sbr.rel (0) target = $region29
    $region28: #{tpu_custom_call.1} parent=1 // pred_region
      %180 = dma.done [#allocation4], 256
    $region29: #{tpu_custom_call.1} parent=1 // pred_fallthru
      _
    %181 = vsyncpa [#allocation3], 1
    %182 = vsyncpa [#allocation6], 1
    %183 = vsyncpa [#allocation4], 1

</llo_original>
